<compile_context>
chip_gen: v5e
topology: v5e:2x2
jax: 0.10.0
libtpu: 0.0.40
codegen_flags: <defaults>
</compile_context>

<pallas_src>
import functools

import jax
import jax.numpy as jnp
from jax.experimental import pallas as pl
from jax.experimental.pallas import tpu as pltpu

IN_FEATURES = 768
LANE = 128
SUBLANE = 8
MAX_TILE_B = 2048  # f32 x tile @2048 rows = 6 MiB; ~15 MiB total double-buffered VMEM.


def lr_kernel(x_ref, w_ref, b_ref, o_ref):
    # x arrives f32 straight from HBM (no wrapper-side copy); cast to bf16 for
    # the MXU.  W is pre-transposed & class-padded to (768, C_pad) bf16.
    x = x_ref[...].astype(jnp.bfloat16)
    logits = jnp.dot(x, w_ref[...], preferred_element_type=jnp.float32) + b_ref[...]
    # Numerically stable softmax over the (padded) class axis.  Padded classes
    # carry a -inf bias, so exp() == 0 there and they never win the max.
    m = jnp.max(logits, axis=-1, keepdims=True)
    e = jnp.exp(logits - m)
    denom = jnp.sum(e, axis=-1, keepdims=True)
    # Exact division (NOT approx reciprocal): rows sum to 1 at f32 precision;
    # the divide hides under the DMA stream of this HBM-bound kernel.
    o_ref[...] = (e / denom).astype(o_ref.dtype)


@functools.partial(jax.jit, static_argnames=("max_tile_b",))
def lr_forward(x, w_t, bias, *, max_tile_b=MAX_TILE_B):
    """x: (B, 768) f32, w_t: (768, C) f32, bias: (1, C) f32 -> (B, C) softmax probs."""
    B, K = x.shape
    Kw, C = w_t.shape
    assert K == IN_FEATURES and Kw == IN_FEATURES

    # Lane-dense class dim: pad C up to a multiple of 128 (exactly 128 for small C).
    c_pad = max(LANE, pl.cdiv(C, LANE) * LANE)

    # Balanced batch tiles: minimal padding (<= 7 rows), large tiles, and at
    # least 2 grid steps when possible so megacore sharding engages both v7x TCs.
    num_tiles = pl.cdiv(B, max_tile_b)
    if num_tiles == 1 and B >= 2 * SUBLANE:
        num_tiles = 2
    tile_b = pl.cdiv(pl.cdiv(B, num_tiles), SUBLANE) * SUBLANE
    b_pad = num_tiles * tile_b

    # x stays f32 in HBM; cast happens inside the kernel -> no extra HBM
    # round-trip of the dominant stream.  Pad only when strictly needed.
    x_p = x if b_pad == B else jnp.pad(x, ((0, b_pad - B), (0, 0)))
    # Weights/bias are tiny and VMEM-resident; one-time pad/cast is negligible.
    w_p = jnp.pad(w_t, ((0, 0), (0, c_pad - C))).astype(jnp.bfloat16)
    bias_p = jnp.pad(
        bias.astype(jnp.float32), ((0, 0), (0, c_pad - C)),
        constant_values=-jnp.inf,
    )

    out = pl.pallas_call(
        lr_kernel,
        out_shape=jax.ShapeDtypeStruct((b_pad, c_pad), jnp.float32),
        grid=(num_tiles,),
        in_specs=[
            pl.BlockSpec((tile_b, K), lambda i: (i, 0)),   # x: streamed, double-buffered
            pl.BlockSpec((K, c_pad), lambda i: (0, 0)),    # weights: VMEM-resident
            pl.BlockSpec((1, c_pad), lambda i: (0, 0)),    # bias: VMEM-resident
        ],
        out_specs=pl.BlockSpec((tile_b, c_pad), lambda i: (i, 0)),
        compiler_params=pltpu.CompilerParams(
            dimension_semantics=("parallel",),             # megacore-shard batch tiles
            vmem_limit_bytes=32 * 1024 * 1024,
        ),
    )(x_p, w_p, bias_p)

    # TODO(synk): consumers that can index the padded (b_pad, c_pad) buffer
    # directly should skip this slice (it re-reads/re-writes the whole output).
    if b_pad == B and c_pad == C:
        return out
    return out[:B, :C]


if __name__ == "__main__":
    num_classes = 10
    batch = 8

    key = jax.random.PRNGKey(0)
    kx, kw, kb = jax.random.split(key, 3)

    # Deterministic parameter init (mimicking nn.Linear's uniform(-1/sqrt(768), 1/sqrt(768)))
    bound = 1.0 / jnp.sqrt(jnp.float32(IN_FEATURES))
    w = jax.random.uniform(kw, (num_classes, IN_FEATURES), jnp.float32, -bound, bound)
    b = jax.random.uniform(kb, (num_classes,), jnp.float32, -bound, bound)
    x = jax.random.normal(kx, (batch, IN_FEATURES), jnp.float32)

    w_t = jnp.transpose(w)              # (768, num_classes)
    b2d = b.reshape(1, num_classes)     # (1, num_classes)

    out = lr_forward(x, w_t, b2d)
    out = jax.block_until_ready(out)

    # Reference computed with the same bf16-input / f32-accumulation contract.
    ref_logits = jnp.dot(
        x.astype(jnp.bfloat16), w_t.astype(jnp.bfloat16),
        preferred_element_type=jnp.float32,
    ) + b2d
    ref = jax.nn.softmax(ref_logits, axis=1)

    assert out.shape == (batch, num_classes)
    assert jnp.allclose(out, ref, atol=1e-3, rtol=1e-3)
    assert jnp.allclose(jnp.sum(out, axis=1), jnp.ones((batch,)), atol=1e-3)

    print("KERNEL_OK")
</pallas_src>

<mosaic_0001>
module attributes {stable_mosaic.version = 11 : i64} {
  func.func @lr_kernel(%arg0: i32, %arg1: memref<8x768xf32, #tpu.memory_space<vmem>>, %arg2: memref<768x128xbf16, #tpu.memory_space<vmem>>, %arg3: memref<1x128xf32, #tpu.memory_space<vmem>>, %arg4: memref<8x128xf32, #tpu.memory_space<vmem>>) attributes {dimension_semantics = [#tpu.dimension_semantics<parallel>], iteration_bounds = array<i64: 1>, scalar_prefetch = 0 : i64, scratch_operands = 0 : i64, tpu.core_type = #tpu.core_type<tc>, window_params = [{transform_indices = @transform_0, window_bounds = array<i64: 8, 768>}, {pipeline_mode = #tpu.pipeline_mode<synchronous>, transform_indices = @transform_1, window_bounds = array<i64: 768, 128>}, {pipeline_mode = #tpu.pipeline_mode<synchronous>, transform_indices = @transform_2, window_bounds = array<i64: 1, 128>}, {transform_indices = @transform_3, window_bounds = array<i64: 8, 128>}]} {
    %c0 = arith.constant 0 : index
    %c0_0 = arith.constant 0 : index
    %0 = vector.load %arg1[%c0, %c0_0] : memref<8x768xf32, #tpu.memory_space<vmem>>, vector<8x768xf32>
    %1 = arith.truncf %0 : vector<8x768xf32> to vector<8x768xbf16>
    %c0_1 = arith.constant 0 : index
    %c0_2 = arith.constant 0 : index
    %2 = vector.load %arg2[%c0_1, %c0_2] : memref<768x128xbf16, #tpu.memory_space<vmem>>, vector<768x128xbf16>
    %cst = arith.constant dense<0.000000e+00> : vector<8x128xf32>
    %3 = tpu.matmul %1, %2, %cst {dimension_numbers = #tpu.dot_dimension_numbers<[1], [0], [0], [1], [0, 0, 1, 1], [], []>} : vector<8x768xbf16>, vector<768x128xbf16>, vector<8x128xf32> -> vector<8x128xf32>
    %c0_3 = arith.constant 0 : index
    %c0_4 = arith.constant 0 : index
    %4 = vector.load %arg3[%c0_3, %c0_4] : memref<1x128xf32, #tpu.memory_space<vmem>>, vector<1x128xf32>
    %5 = vector.broadcast %4 : vector<1x128xf32> to vector<8x128xf32>
    %6 = arith.addf %3, %5 : vector<8x128xf32>
    %cst_5 = arith.constant dense<0xFF800000> : vector<8xf32>
    %7 = vector.multi_reduction <maximumf>, %6, %cst_5 [1] : vector<8x128xf32> to vector<8xf32>
    %8 = vector.shape_cast %7 : vector<8xf32> to vector<8x1xf32>
    %9 = vector.broadcast %8 : vector<8x1xf32> to vector<8x128xf32>
    %10 = arith.subf %6, %9 : vector<8x128xf32>
    %11 = math.exp %10 : vector<8x128xf32>
    %cst_6 = arith.constant dense<0.000000e+00> : vector<8xf32>
    %12 = vector.multi_reduction <add>, %11, %cst_6 [1] : vector<8x128xf32> to vector<8xf32>
    %13 = vector.shape_cast %12 : vector<8xf32> to vector<8x1xf32>
    %14 = vector.broadcast %13 : vector<8x1xf32> to vector<8x128xf32>
    %15 = arith.divf %11, %14 : vector<8x128xf32>
    %c0_7 = arith.constant 0 : index
    %c0_8 = arith.constant 0 : index
    %16 = vector.load %arg4[%c0_7, %c0_8] : memref<8x128xf32, #tpu.memory_space<vmem>>, vector<8x128xf32>
    tpu.vector_store %arg4[%c0_7, %c0_8], %15 {strides = array<i32>} : memref<8x128xf32, #tpu.memory_space<vmem>>, vector<8x128xf32>,
    return
  }
  func.func @transform_0(%arg0: i32) -> (i32, i32) {
    %c0_i32 = arith.constant 0 : i32
    %c0_i32_0 = arith.constant 0 : i32
    return %arg0, %c0_i32 : i32, i32
  }
  func.func @transform_1(%arg0: i32) -> (i32, i32) {
    %c0_i32 = arith.constant 0 : i32
    %c0_i32_0 = arith.constant 0 : i32
    %c0_i32_1 = arith.constant 0 : i32
    return %c0_i32, %c0_i32_0 : i32, i32
  }
  func.func @transform_2(%arg0: i32) -> (i32, i32) {
    %c0_i32 = arith.constant 0 : i32
    %c0_i32_0 = arith.constant 0 : i32
    %c0_i32_1 = arith.constant 0 : i32
    return %c0_i32, %c0_i32_0 : i32, i32
  }
  func.func @transform_3(%arg0: i32) -> (i32, i32) {
    %c0_i32 = arith.constant 0 : i32
    %c0_i32_0 = arith.constant 0 : i32
    return %arg0, %c0_i32 : i32, i32
  }
}

</mosaic_0001>

<llo_original>
// kernel: lr_forward.1
$region0: #{lr_forward.1}
  #allocation0 [shape = 'u32[]', space=smem, size = 0x4, offset = 0x4, fixed_abs, tag = 'smem constant byte address 0x4 - core index']
  #allocation1 [shape = 'u32[72,128]{1,0:T(1,128)}', space=vmem, size = 0x9000, scoped, tag = 'internal scratch']
  %s0 = inlined_call_operand.vmem [shape: f32[8,768], index: 0, kind: input, shape index: {}]
  %s1 = inlined_call_operand.vmem [shape: bf16[768,128], index: 1, kind: input, shape index: {}]
  %s2 = inlined_call_operand.vmem [shape: f32[1,128], index: 2, kind: input, shape index: {}]
  %s3 = inlined_call_operand.hbm [shape: f32[8,128], index: 3, kind: output, shape index: {}]
  %s4 = sld [smem:[#allocation0]]
  $region22: #{lr_forward.1} parent=0
    _
  %s6 = ssub.s32 1, %s4
  %s7 = scalar_select 0, %s6, %s4
  $region1: #{lr_forward.1} parent=0
    #allocation2 [shape = 'u8[4096]{0}', space=vmem, size = 0x1000, scoped, tag = 'output window, operand 0, single buffered']
    #allocation3 [shape = 's32[1]{0}', space=sflag, size = 0x4, scoped, tag = 'scoped memory for lr_forward.1']
    %8 = vsyncpa [#allocation3], 0
    // Predicated region
    $region2: #{lr_forward.1} parent=1 // pred_check
      _
    $region3: #{lr_forward.1} parent=1 // pred_check_branch
      %10 = sbr.rel (0) target = $region5
    $region4: #{lr_forward.1} parent=1 // pred_region
      _
    $region5: #{lr_forward.1} parent=1 // pred_fallthru
      _
    // Predicated region
    $region6: #{lr_forward.1} parent=1 // pred_check
      _
    $region7: #{lr_forward.1} parent=1 // pred_check_branch
      %12 = sbr.rel (0) target = $region9
    $region8: #{lr_forward.1} parent=1 // pred_region
      _
    $region9: #{lr_forward.1} parent=1 // pred_fallthru
      _
    // Predicated region
    $region10: #{lr_forward.1} parent=1 // pred_check
      _
    $region11: #{lr_forward.1} parent=1 // pred_check_branch
      %14 = sbr.rel (0) target = $region13
    $region12: #{lr_forward.1} parent=1 // pred_region
      _
    $region13: #{lr_forward.1} parent=1 // pred_fallthru
      _
    %v15 = vld [vmem:[%s0] sm:$0xff]
    %v16 = vld [vmem:[%s0 + $0x8] sm:$0xff]
    %v17 = vld [vmem:[%s0 + $0x10] sm:$0xff]
    %v18 = vld [vmem:[%s0 + $0x18] sm:$0xff]
    %v19 = vld [vmem:[%s0 + $0x20] sm:$0xff]
    %v20 = vld [vmem:[%s0 + $0x28] sm:$0xff]
    %v21 = vpack.c.bf16 %v15, %v15
    %v22 = vpack.c.bf16 %v16, %v16
    %v23 = vpack.c.bf16 %v17, %v17
    %v24 = vpack.c.bf16 %v18, %v18
    %v25 = vpack.c.bf16 %v19, %v19
    %v26 = vpack.c.bf16 %v20, %v20
    %v27 = vld [vmem:[%s1] sm:$0xf]
    %v28 = vld [vmem:[%s1 + $0x4] sm:$0xf]
    %v29 = vld [vmem:[%s1 + $0x8] sm:$0xf]
    %v30 = vld [vmem:[%s1 + $0xc] sm:$0xf]
    %v31 = vld [vmem:[%s1 + $0x10] sm:$0xf]
    %v32 = vld [vmem:[%s1 + $0x14] sm:$0xf]
    %v33 = vld [vmem:[%s1 + $0x18] sm:$0xf]
    %v34 = vld [vmem:[%s1 + $0x1c] sm:$0xf]
    %v35 = vld [vmem:[%s1 + $0x20] sm:$0xf]
    %v36 = vld [vmem:[%s1 + $0x24] sm:$0xf]
    %v37 = vld [vmem:[%s1 + $0x28] sm:$0xf]
    %v38 = vld [vmem:[%s1 + $0x2c] sm:$0xf]
    %v39 = vld [vmem:[%s1 + $0x30] sm:$0xf]
    %v40 = vld [vmem:[%s1 + $0x34] sm:$0xf]
    %v41 = vld [vmem:[%s1 + $0x38] sm:$0xf]
    %v42 = vld [vmem:[%s1 + $0x3c] sm:$0xf]
    %v43 = vld [vmem:[%s1 + $0x40] sm:$0xf]
    %v44 = vld [vmem:[%s1 + $0x44] sm:$0xf]
    %v45 = vld [vmem:[%s1 + $0x48] sm:$0xf]
    %v46 = vld [vmem:[%s1 + $0x4c] sm:$0xf]
    %v47 = vld [vmem:[%s1 + $0x50] sm:$0xf]
    %v48 = vld [vmem:[%s1 + $0x54] sm:$0xf]
    %v49 = vld [vmem:[%s1 + $0x58] sm:$0xf]
    %v50 = vld [vmem:[%s1 + $0x5c] sm:$0xf]
    %v51 = vld [vmem:[%s1 + $0x60] sm:$0xf]
    %v52 = vld [vmem:[%s1 + $0x64] sm:$0xf]
    %v53 = vld [vmem:[%s1 + $0x68] sm:$0xf]
    %v54 = vld [vmem:[%s1 + $0x6c] sm:$0xf]
    %v55 = vld [vmem:[%s1 + $0x70] sm:$0xf]
    %v56 = vld [vmem:[%s1 + $0x74] sm:$0xf]
    %v57 = vld [vmem:[%s1 + $0x78] sm:$0xf]
    %v58 = vld [vmem:[%s1 + $0x7c] sm:$0xf]
    %v59 = vld [vmem:[%s1 + $0x80] sm:$0xf]
    %v60 = vld [vmem:[%s1 + $0x84] sm:$0xf]
    %v61 = vld [vmem:[%s1 + $0x88] sm:$0xf]
    %v62 = vld [vmem:[%s1 + $0x8c] sm:$0xf]
    %v63 = vld [vmem:[%s1 + $0x90] sm:$0xf]
    %v64 = vld [vmem:[%s1 + $0x94] sm:$0xf]
    %v65 = vld [vmem:[%s1 + $0x98] sm:$0xf]
    %v66 = vld [vmem:[%s1 + $0x9c] sm:$0xf]
    %v67 = vld [vmem:[%s1 + $0xa0] sm:$0xf]
    %v68 = vld [vmem:[%s1 + $0xa4] sm:$0xf]
    %v69 = vld [vmem:[%s1 + $0xa8] sm:$0xf]
    %v70 = vld [vmem:[%s1 + $0xac] sm:$0xf]
    %v71 = vld [vmem:[%s1 + $0xb0] sm:$0xf]
    %v72 = vld [vmem:[%s1 + $0xb4] sm:$0xf]
    %v73 = vld [vmem:[%s1 + $0xb8] sm:$0xf]
    %v74 = vld [vmem:[%s1 + $0xbc] sm:$0xf]
    %v75 = vld [vmem:[%s1 + $0xc0] sm:$0xf]
    %v76 = vld [vmem:[%s1 + $0xc4] sm:$0xf]
    %v77 = vld [vmem:[%s1 + $0xc8] sm:$0xf]
    %v78 = vld [vmem:[%s1 + $0xcc] sm:$0xf]
    %v79 = vld [vmem:[%s1 + $0xd0] sm:$0xf]
    %v80 = vld [vmem:[%s1 + $0xd4] sm:$0xf]
    %v81 = vld [vmem:[%s1 + $0xd8] sm:$0xf]
    %v82 = vld [vmem:[%s1 + $0xdc] sm:$0xf]
    %v83 = vld [vmem:[%s1 + $0xe0] sm:$0xf]
    %v84 = vld [vmem:[%s1 + $0xe4] sm:$0xf]
    %v85 = vld [vmem:[%s1 + $0xe8] sm:$0xf]
    %v86 = vld [vmem:[%s1 + $0xec] sm:$0xf]
    %v87 = vld [vmem:[%s1 + $0xf0] sm:$0xf]
    %v88 = vld [vmem:[%s1 + $0xf4] sm:$0xf]
    %v89 = vld [vmem:[%s1 + $0xf8] sm:$0xf]
    %v90 = vld [vmem:[%s1 + $0xfc] sm:$0xf]
    %v91 = vld [vmem:[%s1 + $0x100] sm:$0xf]
    %v92 = vld [vmem:[%s1 + $0x104] sm:$0xf]
    %v93 = vld [vmem:[%s1 + $0x108] sm:$0xf]
    %v94 = vld [vmem:[%s1 + $0x10c] sm:$0xf]
    %v95 = vld [vmem:[%s1 + $0x110] sm:$0xf]
    %v96 = vld [vmem:[%s1 + $0x114] sm:$0xf]
    %v97 = vld [vmem:[%s1 + $0x118] sm:$0xf]
    %v98 = vld [vmem:[%s1 + $0x11c] sm:$0xf]
    %v99 = vld [vmem:[%s1 + $0x120] sm:$0xf]
    %v100 = vld [vmem:[%s1 + $0x124] sm:$0xf]
    %v101 = vld [vmem:[%s1 + $0x128] sm:$0xf]
    %v102 = vld [vmem:[%s1 + $0x12c] sm:$0xf]
    %v103 = vld [vmem:[%s1 + $0x130] sm:$0xf]
    %v104 = vld [vmem:[%s1 + $0x134] sm:$0xf]
    %v105 = vld [vmem:[%s1 + $0x138] sm:$0xf]
    %v106 = vld [vmem:[%s1 + $0x13c] sm:$0xf]
    %v107 = vld [vmem:[%s1 + $0x140] sm:$0xf]
    %v108 = vld [vmem:[%s1 + $0x144] sm:$0xf]
    %v109 = vld [vmem:[%s1 + $0x148] sm:$0xf]
    %v110 = vld [vmem:[%s1 + $0x14c] sm:$0xf]
    %v111 = vld [vmem:[%s1 + $0x150] sm:$0xf]
    %v112 = vld [vmem:[%s1 + $0x154] sm:$0xf]
    %v113 = vld [vmem:[%s1 + $0x158] sm:$0xf]
    %v114 = vld [vmem:[%s1 + $0x15c] sm:$0xf]
    %v115 = vld [vmem:[%s1 + $0x160] sm:$0xf]
    %v116 = vld [vmem:[%s1 + $0x164] sm:$0xf]
    %v117 = vld [vmem:[%s1 + $0x168] sm:$0xf]
    %v118 = vld [vmem:[%s1 + $0x16c] sm:$0xf]
    %v119 = vld [vmem:[%s1 + $0x170] sm:$0xf]
    %v120 = vld [vmem:[%s1 + $0x174] sm:$0xf]
    %v121 = vld [vmem:[%s1 + $0x178] sm:$0xf]
    %v122 = vld [vmem:[%s1 + $0x17c] sm:$0xf]
    %v123 = vld [vmem:[%s2] sm:$0x1]
    %v125 = vperm.slane %v123, 0
    %v223 = vunpack.c.l.b16 %v27
    %v224 = vunpack.c.l.b16 %v28
    %v225 = vunpack.c.l.b16 %v29
    %v226 = vunpack.c.l.b16 %v30
    %v227 = vunpack.c.l.b16 %v31
    %v228 = vunpack.c.l.b16 %v32
    %v229 = vunpack.c.l.b16 %v33
    %v230 = vunpack.c.l.b16 %v34
    %v231 = vunpack.c.l.b16 %v35
    %v232 = vunpack.c.l.b16 %v36
    %v233 = vunpack.c.l.b16 %v37
    %v234 = vunpack.c.l.b16 %v38
    %v235 = vunpack.c.l.b16 %v39
    %v236 = vunpack.c.l.b16 %v40
    %v237 = vunpack.c.l.b16 %v41
    %v238 = vunpack.c.l.b16 %v42
    %v239 = vunpack.c.l.b16 %v43
    %v240 = vunpack.c.l.b16 %v44
    %v241 = vunpack.c.l.b16 %v45
    %v242 = vunpack.c.l.b16 %v46
    %v243 = vunpack.c.l.b16 %v47
    %v244 = vunpack.c.l.b16 %v48
    %v245 = vunpack.c.l.b16 %v49
    %v246 = vunpack.c.l.b16 %v50
    %v247 = vunpack.c.l.b16 %v51
    %v248 = vunpack.c.l.b16 %v52
    %v249 = vunpack.c.l.b16 %v53
    %v250 = vunpack.c.l.b16 %v54
    %v251 = vunpack.c.l.b16 %v55
    %v252 = vunpack.c.l.b16 %v56
    %v253 = vunpack.c.l.b16 %v57
    %v254 = vunpack.c.l.b16 %v58
    %v255 = vunpack.c.l.b16 %v59
    %v256 = vunpack.c.l.b16 %v60
    %v257 = vunpack.c.l.b16 %v61
    %v258 = vunpack.c.l.b16 %v62
    %v259 = vunpack.c.l.b16 %v63
    %v260 = vunpack.c.l.b16 %v64
    %v261 = vunpack.c.l.b16 %v65
    %v262 = vunpack.c.l.b16 %v66
    %v263 = vunpack.c.l.b16 %v67
    %v264 = vunpack.c.l.b16 %v68
    %v265 = vunpack.c.l.b16 %v69
    %v266 = vunpack.c.l.b16 %v70
    %v267 = vunpack.c.l.b16 %v71
    %v268 = vunpack.c.l.b16 %v72
    %v269 = vunpack.c.l.b16 %v73
    %v270 = vunpack.c.l.b16 %v74
    %v271 = vunpack.c.l.b16 %v75
    %v272 = vunpack.c.l.b16 %v76
    %v273 = vunpack.c.l.b16 %v77
    %v274 = vunpack.c.l.b16 %v78
    %v275 = vunpack.c.l.b16 %v79
    %v276 = vunpack.c.l.b16 %v80
    %v277 = vunpack.c.l.b16 %v81
    %v278 = vunpack.c.l.b16 %v82
    %v279 = vunpack.c.l.b16 %v83
    %v280 = vunpack.c.l.b16 %v84
    %v281 = vunpack.c.l.b16 %v85
    %v282 = vunpack.c.l.b16 %v86
    %v283 = vunpack.c.l.b16 %v87
    %v284 = vunpack.c.l.b16 %v88
    %v285 = vunpack.c.l.b16 %v89
    %v286 = vunpack.c.l.b16 %v90
    %v287 = vunpack.c.l.b16 %v91
    %v288 = vunpack.c.l.b16 %v92
    %v289 = vunpack.c.l.b16 %v93
    %v290 = vunpack.c.l.b16 %v94
    %v291 = vunpack.c.l.b16 %v95
    %v292 = vunpack.c.l.b16 %v96
    %v293 = vunpack.c.l.b16 %v97
    %v294 = vunpack.c.l.b16 %v98
    %v295 = vunpack.c.l.b16 %v99
    %v296 = vunpack.c.l.b16 %v100
    %v297 = vunpack.c.l.b16 %v101
    %v298 = vunpack.c.l.b16 %v102
    %v299 = vunpack.c.l.b16 %v103
    %v300 = vunpack.c.l.b16 %v104
    %v301 = vunpack.c.l.b16 %v105
    %v302 = vunpack.c.l.b16 %v106
    %v303 = vunpack.c.l.b16 %v107
    %v304 = vunpack.c.l.b16 %v108
    %v305 = vunpack.c.l.b16 %v109
    %v306 = vunpack.c.l.b16 %v110
    %v307 = vunpack.c.l.b16 %v111
    %v308 = vunpack.c.l.b16 %v112
    %v309 = vunpack.c.l.b16 %v113
    %v310 = vunpack.c.l.b16 %v114
    %v311 = vunpack.c.l.b16 %v115
    %v312 = vunpack.c.l.b16 %v116
    %v313 = vunpack.c.l.b16 %v117
    %v314 = vunpack.c.l.b16 %v118
    %v315 = vunpack.c.l.b16 %v119
    %v316 = vunpack.c.l.b16 %v120
    %v317 = vunpack.c.l.b16 %v121
    %v318 = vunpack.c.l.b16 %v122
    %v319 = vpack.c.b16 %v224, %v223
    %v320 = vpack.c.b16 %v226, %v225
    %v321 = vpack.c.b16 %v228, %v227
    %v322 = vpack.c.b16 %v230, %v229
    %v323 = vpack.c.b16 %v232, %v231
    %v324 = vpack.c.b16 %v234, %v233
    %v325 = vpack.c.b16 %v236, %v235
    %v326 = vpack.c.b16 %v238, %v237
    %v327 = vpack.c.b16 %v240, %v239
    %v328 = vpack.c.b16 %v242, %v241
    %v329 = vpack.c.b16 %v244, %v243
    %v330 = vpack.c.b16 %v246, %v245
    %v331 = vpack.c.b16 %v248, %v247
    %v332 = vpack.c.b16 %v250, %v249
    %v333 = vpack.c.b16 %v252, %v251
    %v334 = vpack.c.b16 %v254, %v253
    %v335 = vpack.c.b16 %v256, %v255
    %v336 = vpack.c.b16 %v258, %v257
    %v337 = vpack.c.b16 %v260, %v259
    %v338 = vpack.c.b16 %v262, %v261
    %v339 = vpack.c.b16 %v264, %v263
    %v340 = vpack.c.b16 %v266, %v265
    %v341 = vpack.c.b16 %v268, %v267
    %v342 = vpack.c.b16 %v270, %v269
    %v343 = vpack.c.b16 %v272, %v271
    %v344 = vpack.c.b16 %v274, %v273
    %v345 = vpack.c.b16 %v276, %v275
    %v346 = vpack.c.b16 %v278, %v277
    %v347 = vpack.c.b16 %v280, %v279
    %v348 = vpack.c.b16 %v282, %v281
    %v349 = vpack.c.b16 %v284, %v283
    %v350 = vpack.c.b16 %v286, %v285
    %v351 = vpack.c.b16 %v288, %v287
    %v352 = vpack.c.b16 %v290, %v289
    %v353 = vpack.c.b16 %v292, %v291
    %v354 = vpack.c.b16 %v294, %v293
    %v355 = vpack.c.b16 %v296, %v295
    %v356 = vpack.c.b16 %v298, %v297
    %v357 = vpack.c.b16 %v300, %v299
    %v358 = vpack.c.b16 %v302, %v301
    %v359 = vpack.c.b16 %v304, %v303
    %v360 = vpack.c.b16 %v306, %v305
    %v361 = vpack.c.b16 %v308, %v307
    %v362 = vpack.c.b16 %v310, %v309
    %v363 = vpack.c.b16 %v312, %v311
    %v364 = vpack.c.b16 %v314, %v313
    %v365 = vpack.c.b16 %v316, %v315
    %v366 = vpack.c.b16 %v318, %v317
    %415 = vmatpush.bf16.msra.mxu0 %v326
    %416 = vmatpush.bf16.msra.mxu0 %v325
    %417 = vmatpush.bf16.msra.mxu0 %v324
    %418 = vmatpush.bf16.msra.mxu0 %v323
    %419 = vmatpush.bf16.msra.mxu0 %v322
    %420 = vmatpush.bf16.msra.mxu0 %v321
    %421 = vmatpush.bf16.msra.mxu0 %v320
    %422 = vmatpush.bf16.msra.mxu0 %v319
    %423 = vmatmul.bf16.gmra.mxu0 %v21
    %v424 = vpop.f32.mrf.mxu0
    %v425 = vadd.f32 %v125, %v424
    %v426 = vpop.f32.mrf.mxu0
    %427 = vdwg.mxu0
    %428 = vmatpush.bf16.msra.mxu0 %v334
    %429 = vmatpush.bf16.msra.mxu0 %v333
    %430 = vmatpush.bf16.msra.mxu0 %v332
    %431 = vmatpush.bf16.msra.mxu0 %v331
    %432 = vmatpush.bf16.msra.mxu0 %v330
    %433 = vmatpush.bf16.msra.mxu0 %v329
    %434 = vmatpush.bf16.msra.mxu0 %v328
    %435 = vmatpush.bf16.msra.mxu0 %v327
    %436 = vmatmul.bf16.gmra.mxu0 %v22
    %v437 = vpop.f32.mrf.mxu0
    %v438 = vadd.f32 %v425, %v437
    %v439 = vpop.f32.mrf.mxu0
    %440 = vdwg.mxu0
    %441 = vmatpush.bf16.msra.mxu0 %v342
    %442 = vmatpush.bf16.msra.mxu0 %v341
    %443 = vmatpush.bf16.msra.mxu0 %v340
    %444 = vmatpush.bf16.msra.mxu0 %v339
    %445 = vmatpush.bf16.msra.mxu0 %v338
    %446 = vmatpush.bf16.msra.mxu0 %v337
    %447 = vmatpush.bf16.msra.mxu0 %v336
    %448 = vmatpush.bf16.msra.mxu0 %v335
    %449 = vmatmul.bf16.gmra.mxu0 %v23
    %v450 = vpop.f32.mrf.mxu0
    %v451 = vadd.f32 %v438, %v450
    %v452 = vpop.f32.mrf.mxu0
    %453 = vdwg.mxu0
    %454 = vmatpush.bf16.msra.mxu0 %v350
    %455 = vmatpush.bf16.msra.mxu0 %v349
    %456 = vmatpush.bf16.msra.mxu0 %v348
    %457 = vmatpush.bf16.msra.mxu0 %v347
    %458 = vmatpush.bf16.msra.mxu0 %v346
    %459 = vmatpush.bf16.msra.mxu0 %v345
    %460 = vmatpush.bf16.msra.mxu0 %v344
    %461 = vmatpush.bf16.msra.mxu0 %v343
    %462 = vmatmul.bf16.gmra.mxu0 %v24
    %v463 = vpop.f32.mrf.mxu0
    %v464 = vadd.f32 %v451, %v463
    %v465 = vpop.f32.mrf.mxu0
    %466 = vdwg.mxu0
    %467 = vmatpush.bf16.msra.mxu0 %v358
    %468 = vmatpush.bf16.msra.mxu0 %v357
    %469 = vmatpush.bf16.msra.mxu0 %v356
    %470 = vmatpush.bf16.msra.mxu0 %v355
    %471 = vmatpush.bf16.msra.mxu0 %v354
    %472 = vmatpush.bf16.msra.mxu0 %v353
    %473 = vmatpush.bf16.msra.mxu0 %v352
    %474 = vmatpush.bf16.msra.mxu0 %v351
    %475 = vmatmul.bf16.gmra.mxu0 %v25
    %v476 = vpop.f32.mrf.mxu0
    %v477 = vadd.f32 %v464, %v476
    %v478 = vpop.f32.mrf.mxu0
    %479 = vdwg.mxu0
    %480 = vmatpush.bf16.msra.mxu0 %v366
    %481 = vmatpush.bf16.msra.mxu0 %v365
    %482 = vmatpush.bf16.msra.mxu0 %v364
    %483 = vmatpush.bf16.msra.mxu0 %v363
    %484 = vmatpush.bf16.msra.mxu0 %v362
    %485 = vmatpush.bf16.msra.mxu0 %v361
    %486 = vmatpush.bf16.msra.mxu0 %v360
    %487 = vmatpush.bf16.msra.mxu0 %v359
    %488 = vmatmul.bf16.gmra.mxu0 %v26
    %v489 = vpop.f32.mrf.mxu0
    %v490 = vadd.f32 %v477, %v489
    %v491 = vpop.f32.mrf.mxu0
    %492 = vdwg.mxu0
    %493 = vmax.xlane.f32.xlu0 %v490
    %v494 = vpop.xlane.xlu0 %493
    %v495 = vsub.f32 %v490, %v494
    %v496 = vmul.f32 %v495, 1.442695
    %v497 = vpow.pop %v496
    %498 = vadd.xlane.f32.xlu0 %v497
    %v499 = vpop.xlane.xlu0 %498
    %v500 = vrcp.pop %v499
    %v501 = vmul.f32 %v499, %v500
    %v502 = vsub.f32 1.0, %v501
    %v503 = vmul.f32 %v500, %v502
    %v504 = vadd.f32 %v500, %v503
    %vm505 = vweird.f32 %v499
    %vm506 = vweird.f32 %v500
    %vm507 = vmor %vm505, %vm506
    %v508 = vsel %vm507, %v500, %v504
    %v509 = vand.u32 2147483647, %v499
    %vm510 = vcmp.eq.f32.partialorder %v509, 8.507059e+37
    %v511 = vand.u32 %v499, 2147483648
    %v512 = vor.u32 1.1754944e-38, %v511
    %v513 = vsel %vm510, %v512, %v508
    %v514 = vmul.f32 %v497, %v513
    %515 = vst [vmem:[#allocation2] sm:$0xff] %v514
    // Predicated region
    $region14: #{lr_forward.1} parent=1 // pred_check
      _
    $region15: #{lr_forward.1} parent=1 // pred_check_branch
      %517 = sbr.rel (0) target = $region17
    $region16: #{lr_forward.1} parent=1 // pred_region
      %519 = vsyncadd [#allocation3], 0
      %s521 = sshll.u32 [#allocation2], 4
      %s522 = int_to_ptr.vmem [resolvable:$true] %s521
      %s523 = sshll.u32 %s3, 4
      %s524 = int_to_ptr.hbm [resolvable:$true] %s523
      %526 = dma.vmem_to_hbm [thread:$0]  %s522, 128, %s524, [#allocation3]
    $region17: #{lr_forward.1} parent=1 // pred_fallthru
      _
    // Predicated region
    $region18: #{lr_forward.1} parent=1 // pred_check
      _
    $region19: #{lr_forward.1} parent=1 // pred_check_branch
      %528 = sbr.rel (0) target = $region21
    $region20: #{lr_forward.1} parent=1 // pred_region
      %530 = dma.done [#allocation3], 128
    $region21: #{lr_forward.1} parent=1 // pred_fallthru
      _
    %531 = vsyncpa [#allocation3], 1

</llo_original>
